<compile_context>
chip_gen: v7x
topology: tpu7x:2x2x1
jax: 0.10.0
libtpu: 0.0.40
codegen_flags: <defaults>
</compile_context>

<pallas_src>
import functools

import jax
import jax.numpy as jnp
import numpy as np
from jax.experimental import pallas as pl
from jax.experimental.pallas import tpu as pltpu


_BN_EPS = 1e-5
_LANE = 128


def _rup(c, m=_LANE):
    return ((c + m - 1) // m) * m


def _full_spec(shape):
    zeros = (0,) * len(shape)
    return pl.BlockSpec(shape, lambda i, _z=zeros: _z)


# ----------------------------------------------------------------------------- kernels

def _bn_rows(y, gamma, beta, eps):
    # y: [rows, C]; per-channel train-mode BatchNorm (biased variance) + affine.
    mean = jnp.mean(y, axis=0, keepdims=True)
    var = jnp.mean(jnp.square(y - mean), axis=0, keepdims=True)
    return (y - mean) * jax.lax.rsqrt(var + eps) * gamma + beta


def _conv1_relu_bn_kernel(x_ref, w1_ref, g1_ref, b1_ref, y_ref, *, eps):
    # x_ref: [N*H*W, Cin_p]  w1_ref: [Cin_p, Cmid_p]  -> y_ref: [N*H*W, Cmid_p]
    r = jnp.dot(x_ref[...], w1_ref[...], preferred_element_type=jnp.float32)
    r = jnp.maximum(r, 0.0)                                   # F.relu
    y_ref[...] = _bn_rows(r, g1_ref[...], b1_ref[...], eps)   # norm1


def _tail_kernel(col_ref, w2_ref, g2_ref, b2_ref, w3_ref, g3_ref, b3_ref,
                 xs_ref, ws_ref, gs_ref, bs_ref, out_ref, *, eps, has_shortcut):
    # col_ref: [R, 9*Cmid_p] strided im2col of the BN1 output (stride already folded).
    # conv2 (3x3, stride folded) as ONE K=9*Cmid_p matmul, then ReLU + BN2.
    r = jnp.dot(col_ref[...], w2_ref[...], preferred_element_type=jnp.float32)
    r = jnp.maximum(r, 0.0)
    r = _bn_rows(r, g2_ref[...], b2_ref[...], eps)

    # conv3 (1x1) + BN3 (no ReLU before norm3 in the reference module).
    r = jnp.dot(r, w3_ref[...], preferred_element_type=jnp.float32)
    r = _bn_rows(r, g3_ref[...], b3_ref[...], eps)

    if has_shortcut:                                          # projection shortcut
        s = jnp.dot(xs_ref[...], ws_ref[...], preferred_element_type=jnp.float32)
        s = _bn_rows(s, gs_ref[...], bs_ref[...], eps)
    else:                                                     # identity shortcut
        s = xs_ref[...]

    out_ref[...] = jnp.maximum(r + s, 0.0)                    # residual add + ReLU


# ----------------------------------------------------------------------------- pallas wrappers

def _conv1_relu_bn(x_flat, w1, g1, b1):
    rows = x_flat.shape[0]
    cmid_p = w1.shape[1]
    return pl.pallas_call(
        functools.partial(_conv1_relu_bn_kernel, eps=_BN_EPS),
        out_shape=jax.ShapeDtypeStruct((rows, cmid_p), jnp.float32),
        grid=(1,),
        in_specs=[_full_spec(a.shape) for a in (x_flat, w1, g1, b1)],
        out_specs=_full_spec((rows, cmid_p)),
        compiler_params=pltpu.CompilerParams(dimension_semantics=("arbitrary",)),
    )(x_flat, w1, g1, b1)


def _tail(col, w2col, g2, b2, w3, g3, b3, xs, ws, gs, bs, *, has_shortcut):
    rows = col.shape[0]
    cout_p = w3.shape[1]
    args = (col, w2col, g2, b2, w3, g3, b3, xs, ws, gs, bs)
    return pl.pallas_call(
        functools.partial(_tail_kernel, eps=_BN_EPS, has_shortcut=has_shortcut),
        out_shape=jax.ShapeDtypeStruct((rows, cout_p), jnp.float32),
        grid=(1,),
        in_specs=[_full_spec(a.shape) for a in args],
        out_specs=_full_spec((rows, cout_p)),
        compiler_params=pltpu.CompilerParams(dimension_semantics=("arbitrary",)),
    )(*args)


# ----------------------------------------------------------------------------- module wrapper

def init_params(key, in_channels, mid_channels, out_channels, stride=1):
    """Deterministic synthetic init (PyTorch conv kaiming-uniform-ish bounds)."""
    has_shortcut = (stride != 1) or (in_channels != out_channels)
    ks = jax.random.split(key, 12)

    def conv_init(k, shape):
        fan_in = shape[1] * shape[2] * shape[3]
        bound = 1.0 / float(np.sqrt(fan_in))
        return jax.random.uniform(k, shape, jnp.float32, -bound, bound)

    def bn_init(kg, kb, c):
        g = jax.random.uniform(kg, (c,), jnp.float32, 0.5, 1.5)
        b = jax.random.uniform(kb, (c,), jnp.float32, -0.5, 0.5)
        return g, b

    p = dict(conv1_w=conv_init(ks[0], (mid_channels, in_channels, 1, 1)),
             conv2_w=conv_init(ks[3], (mid_channels, mid_channels, 3, 3)),
             conv3_w=conv_init(ks[6], (out_channels, mid_channels, 1, 1)))
    p["bn1_g"], p["bn1_b"] = bn_init(ks[1], ks[2], mid_channels)
    p["bn2_g"], p["bn2_b"] = bn_init(ks[4], ks[5], mid_channels)
    p["bn3_g"], p["bn3_b"] = bn_init(ks[7], ks[8], out_channels)
    if has_shortcut:
        p["shortcut_w"] = conv_init(ks[9], (out_channels, in_channels, 1, 1))
        p["bns_g"], p["bns_b"] = bn_init(ks[10], ks[11], out_channels)
    return p


def bottleneck_prunednet_forward(params, x_nchw, *, stride=1):
    conv1_w, conv2_w, conv3_w = params["conv1_w"], params["conv2_w"], params["conv3_w"]
    mid_c, in_c = conv1_w.shape[0], conv1_w.shape[1]
    out_c = conv3_w.shape[0]
    has_shortcut = "shortcut_w" in params
    if not has_shortcut:
        assert stride == 1 and in_c == out_c, "identity shortcut requires stride=1, in==out"

    n, _, h, w = x_nchw.shape
    ho = (h - 1) // stride + 1
    wo = (w - 1) // stride + 1
    cin_p, cmid_p, cout_p = _rup(in_c), _rup(mid_c), _rup(out_c)

    def pad_mat(m, r, c):
        return jnp.pad(m, ((0, r - m.shape[0]), (0, c - m.shape[1])))

    def pad_vec(v, c):
        return jnp.pad(v, (0, c - v.shape[0])).reshape(1, c)

    # glue: NCHW -> lane-dense channels-last slab (channels padded to 128 lanes).
    x_nhwc = jnp.transpose(x_nchw, (0, 2, 3, 1)).astype(jnp.float32)
    x_nhwc_p = jnp.pad(x_nhwc, ((0, 0), (0, 0), (0, 0), (0, cin_p - in_c)))
    x_flat = x_nhwc_p.reshape(n * h * w, cin_p)

    w1 = pad_mat(conv1_w[:, :, 0, 0].T, cin_p, cmid_p)
    g1 = pad_vec(params["bn1_g"], cmid_p)
    b1 = pad_vec(params["bn1_b"], cmid_p)

    # stage 1 (Pallas, fused): conv1 + ReLU + BN1.
    y1 = _conv1_relu_bn(x_flat, w1, g1, b1).reshape(n, h, w, cmid_p)

    # glue: zero-pad(1) + STRIDED im2col -> stride folded, only needed pixels computed.
    y1p = jnp.pad(y1, ((0, 0), (1, 1), (1, 1), (0, 0)))
    taps = []
    for kh in range(3):
        for kw in range(3):
            taps.append(y1p[:, kh:kh + stride * (ho - 1) + 1:stride,
                              kw:kw + stride * (wo - 1) + 1:stride, :])
    col = jnp.concatenate(taps, axis=-1).reshape(n * ho * wo, 9 * cmid_p)

    w2_hwio = jnp.transpose(conv2_w, (2, 3, 1, 0))                    # [3,3,I,O]
    w2_hwio = jnp.pad(w2_hwio, ((0, 0), (0, 0),
                                (0, cmid_p - mid_c), (0, cmid_p - mid_c)))
    w2col = w2_hwio.reshape(9 * cmid_p, cmid_p)                       # matches tap order
    g2 = pad_vec(params["bn2_g"], cmid_p)
    b2 = pad_vec(params["bn2_b"], cmid_p)

    w3 = pad_mat(conv3_w[:, :, 0, 0].T, cmid_p, cout_p)
    g3 = pad_vec(params["bn3_g"], cout_p)
    b3 = pad_vec(params["bn3_b"], cout_p)

    # shortcut operand: stride folded by subsampling x before the 1x1 matmul.
    xs = x_nhwc_p[:, ::stride, ::stride, :].reshape(n * ho * wo, cin_p)
    if has_shortcut:
        ws = pad_mat(params["shortcut_w"][:, :, 0, 0].T, cin_p, cout_p)
        gs = pad_vec(params["bns_g"], cout_p)
        bs = pad_vec(params["bns_b"], cout_p)
    else:
        ws = jnp.zeros((cin_p, cout_p), jnp.float32)                  # unused (static branch)
        gs = jnp.zeros((1, cout_p), jnp.float32)
        bs = jnp.zeros((1, cout_p), jnp.float32)

    # stage 2 (Pallas, fused): conv2 + ReLU + BN2 + conv3 + BN3 + shortcut + add + ReLU.
    out = _tail(col, w2col, g2, b2, w3, g3, b3, xs, ws, gs, bs,
                has_shortcut=has_shortcut)
    out = out.reshape(n, ho, wo, cout_p)[..., :out_c]
    return jnp.transpose(out, (0, 3, 1, 2))                           # back to NCHW


# ----------------------------------------------------------------------------- reference

def reference_forward(params, x, *, stride=1):
    eps = _BN_EPS
    dn = ("NCHW", "OIHW", "NCHW")

    def bn(y, g, b):
        mean = y.mean(axis=(0, 2, 3), keepdims=True)
        var = ((y - mean) ** 2).mean(axis=(0, 2, 3), keepdims=True)
        return ((y - mean) * jax.lax.rsqrt(var + eps) * g.reshape(1, -1, 1, 1)
                + b.reshape(1, -1, 1, 1))

    conv = jax.lax.conv_general_dilated
    r = conv(x, params["conv1_w"], (1, 1), ((0, 0), (0, 0)), dimension_numbers=dn)
    r = bn(jnp.maximum(r, 0.0), params["bn1_g"], params["bn1_b"])
    r = conv(r, params["conv2_w"], (stride, stride), ((1, 1), (1, 1)), dimension_numbers=dn)
    r = bn(jnp.maximum(r, 0.0), params["bn2_g"], params["bn2_b"])
    r = conv(r, params["conv3_w"], (1, 1), ((0, 0), (0, 0)), dimension_numbers=dn)
    r = bn(r, params["bn3_g"], params["bn3_b"])
    if "shortcut_w" in params:
        s = conv(x, params["shortcut_w"], (stride, stride), ((0, 0), (0, 0)),
                 dimension_numbers=dn)
        s = bn(s, params["bns_g"], params["bns_b"])
    else:
        s = x
    return jnp.maximum(r + s, 0.0)


# ----------------------------------------------------------------------------- main

if __name__ == "__main__":
    key = jax.random.PRNGKey(0)
    kp1, kp2, kx = jax.random.split(key, 3)
    x = jax.random.normal(kx, (2, 16, 16, 16), jnp.float32)   # N=2, C=16, H=W=16

    # Case 1: downsampling bottleneck with projection shortcut (stride=2, in != out).
    in_c, mid_c, out_c, stride = 16, 8, 32, 2
    params = init_params(kp1, in_c, mid_c, out_c, stride=stride)
    out = jax.block_until_ready(bottleneck_prunednet_forward(params, x, stride=stride))
    ref = reference_forward(params, x, stride=stride)
    assert out.shape == ref.shape, (out.shape, ref.shape)
    err = float(jnp.max(jnp.abs(out - ref)))
    assert err < 1e-3, f"max abs error too large (projection case): {err}"

    # Case 2: identity shortcut (stride=1, in == out).
    params2 = init_params(kp2, 16, 8, 16, stride=1)
    out2 = jax.block_until_ready(bottleneck_prunednet_forward(params2, x, stride=1))
    ref2 = reference_forward(params2, x, stride=1)
    assert out2.shape == ref2.shape, (out2.shape, ref2.shape)
    err2 = float(jnp.max(jnp.abs(out2 - ref2)))
    assert err2 < 1e-3, f"max abs error too large (identity case): {err2}"

    print("KERNEL_OK")
</pallas_src>

<mosaic_0001>
module attributes {stable_mosaic.version = 11 : i64} {
  func.func @_conv1_relu_bn_kernel(%arg0: i32, %arg1: memref<512x128xf32, #tpu.memory_space<vmem>>, %arg2: memref<128x128xf32, #tpu.memory_space<vmem>>, %arg3: memref<1x128xf32, #tpu.memory_space<vmem>>, %arg4: memref<1x128xf32, #tpu.memory_space<vmem>>, %arg5: memref<512x128xf32, #tpu.memory_space<vmem>>) attributes {dimension_semantics = [#tpu.dimension_semantics<arbitrary>], iteration_bounds = array<i64: 1>, scalar_prefetch = 0 : i64, scratch_operands = 0 : i64, tpu.core_type = #tpu.core_type<tc>, window_params = [{pipeline_mode = #tpu.pipeline_mode<synchronous>, transform_indices = @transform_0, window_bounds = array<i64: 512, 128>}, {pipeline_mode = #tpu.pipeline_mode<synchronous>, transform_indices = @transform_1, window_bounds = array<i64: 128, 128>}, {pipeline_mode = #tpu.pipeline_mode<synchronous>, transform_indices = @transform_2, window_bounds = array<i64: 1, 128>}, {pipeline_mode = #tpu.pipeline_mode<synchronous>, transform_indices = @transform_3, window_bounds = array<i64: 1, 128>}, {pipeline_mode = #tpu.pipeline_mode<synchronous>, transform_indices = @transform_4, window_bounds = array<i64: 512, 128>}]} {
    %c0 = arith.constant 0 : index
    %c0_0 = arith.constant 0 : index
    %0 = vector.load %arg1[%c0, %c0_0] : memref<512x128xf32, #tpu.memory_space<vmem>>, vector<512x128xf32>
    %c0_1 = arith.constant 0 : index
    %c0_2 = arith.constant 0 : index
    %1 = vector.load %arg2[%c0_1, %c0_2] : memref<128x128xf32, #tpu.memory_space<vmem>>, vector<128x128xf32>
    %cst = arith.constant dense<0.000000e+00> : vector<512x128xf32>
    %2 = tpu.matmul %0, %1, %cst {dimension_numbers = #tpu.dot_dimension_numbers<[1], [0], [0], [1], [0, 0, 1, 1], [], []>} : vector<512x128xf32>, vector<128x128xf32>, vector<512x128xf32> -> vector<512x128xf32>
    %cst_3 = arith.constant 0.000000e+00 : f32
    %3 = vector.broadcast %cst_3 : f32 to vector<512x128xf32>
    %4 = arith.maximumf %2, %3 : vector<512x128xf32>
    %c0_4 = arith.constant 0 : index
    %c0_5 = arith.constant 0 : index
    %5 = vector.load %arg3[%c0_4, %c0_5] : memref<1x128xf32, #tpu.memory_space<vmem>>, vector<1x128xf32>
    %c0_6 = arith.constant 0 : index
    %c0_7 = arith.constant 0 : index
    %6 = vector.load %arg4[%c0_6, %c0_7] : memref<1x128xf32, #tpu.memory_space<vmem>>, vector<1x128xf32>
    %cst_8 = arith.constant dense<0.000000e+00> : vector<128xf32>
    %7 = vector.multi_reduction <add>, %4, %cst_8 [0] : vector<512x128xf32> to vector<128xf32>
    %8 = vector.shape_cast %7 : vector<128xf32> to vector<1x128xf32>
    %cst_9 = arith.constant 5.120000e+02 : f32
    %9 = vector.broadcast %cst_9 : f32 to vector<1x128xf32>
    %10 = arith.divf %8, %9 : vector<1x128xf32>
    %11 = vector.broadcast %10 : vector<1x128xf32> to vector<512x128xf32>
    %12 = arith.subf %4, %11 : vector<512x128xf32>
    %13 = arith.mulf %12, %12 : vector<512x128xf32>
    %cst_10 = arith.constant dense<0.000000e+00> : vector<128xf32>
    %14 = vector.multi_reduction <add>, %13, %cst_10 [0] : vector<512x128xf32> to vector<128xf32>
    %15 = vector.shape_cast %14 : vector<128xf32> to vector<1x128xf32>
    %cst_11 = arith.constant 5.120000e+02 : f32
    %16 = vector.broadcast %cst_11 : f32 to vector<1x128xf32>
    %17 = arith.divf %15, %16 : vector<1x128xf32>
    %18 = vector.broadcast %10 : vector<1x128xf32> to vector<512x128xf32>
    %19 = arith.subf %4, %18 : vector<512x128xf32>
    %cst_12 = arith.constant 9.99999974E-6 : f32
    %20 = vector.broadcast %cst_12 : f32 to vector<1x128xf32>
    %21 = arith.addf %17, %20 : vector<1x128xf32>
    %22 = math.rsqrt %21 : vector<1x128xf32>
    %23 = vector.broadcast %22 : vector<1x128xf32> to vector<512x128xf32>
    %24 = arith.mulf %19, %23 : vector<512x128xf32>
    %25 = vector.broadcast %5 : vector<1x128xf32> to vector<512x128xf32>
    %26 = arith.mulf %24, %25 : vector<512x128xf32>
    %27 = vector.broadcast %6 : vector<1x128xf32> to vector<512x128xf32>
    %28 = arith.addf %26, %27 : vector<512x128xf32>
    %c0_13 = arith.constant 0 : index
    %c0_14 = arith.constant 0 : index
    %29 = vector.load %arg5[%c0_13, %c0_14] : memref<512x128xf32, #tpu.memory_space<vmem>>, vector<512x128xf32>
    tpu.vector_store %arg5[%c0_13, %c0_14], %28 {strides = array<i32>} : memref<512x128xf32, #tpu.memory_space<vmem>>, vector<512x128xf32>,
    return
  }
  func.func @transform_0(%arg0: i32) -> (i32, i32) {
    %c0_i32 = arith.constant 0 : i32
    %c0_i32_0 = arith.constant 0 : i32
    %c0_i32_1 = arith.constant 0 : i32
    return %c0_i32, %c0_i32_0 : i32, i32
  }
  func.func @transform_1(%arg0: i32) -> (i32, i32) {
    %c0_i32 = arith.constant 0 : i32
    %c0_i32_0 = arith.constant 0 : i32
    %c0_i32_1 = arith.constant 0 : i32
    return %c0_i32, %c0_i32_0 : i32, i32
  }
  func.func @transform_2(%arg0: i32) -> (i32, i32) {
    %c0_i32 = arith.constant 0 : i32
    %c0_i32_0 = arith.constant 0 : i32
    %c0_i32_1 = arith.constant 0 : i32
    return %c0_i32, %c0_i32_0 : i32, i32
  }
  func.func @transform_3(%arg0: i32) -> (i32, i32) {
    %c0_i32 = arith.constant 0 : i32
    %c0_i32_0 = arith.constant 0 : i32
    %c0_i32_1 = arith.constant 0 : i32
    return %c0_i32, %c0_i32_0 : i32, i32
  }
  func.func @transform_4(%arg0: i32) -> (i32, i32) {
    %c0_i32 = arith.constant 0 : i32
    %c0_i32_0 = arith.constant 0 : i32
    %c0_i32_1 = arith.constant 0 : i32
    return %c0_i32, %c0_i32_0 : i32, i32
  }
}

</mosaic_0001>

<llo_original>
// kernel: tpu_custom_call.1
$region0: #{tpu_custom_call.1}
  #allocation0 [shape = 'u32[]', space=smem, size = 0x4, offset = 0x4, fixed_abs, tag = 'smem constant byte address 0x4 - core index']
  #allocation1 [shape = 'u32[144,128]{1,0:T(1,128)}', space=vmem, size = 0x12000, scoped, tag = 'internal scratch']
  %s0 = inlined_call_operand.hbm [shape: f32[512,128], index: 0, kind: input, shape index: {}]
  %s1 = inlined_call_operand.hbm [shape: f32[128,128], index: 1, kind: input, shape index: {}]
  %s2 = inlined_call_operand.vmem [shape: f32[1,128], index: 2, kind: input, shape index: {}]
  %s3 = inlined_call_operand.vmem [shape: f32[1,128], index: 3, kind: input, shape index: {}]
  %s4 = inlined_call_operand.hbm [shape: f32[512,128], index: 4, kind: output, shape index: {}]
  %s5 = sld [smem:[#allocation0]]
  $region34: #{tpu_custom_call.1} parent=0
    _
  %s7 = ssub.s32 1, %s5
  %s8 = scalar_select 0, %s7, %s5
  $region1: #{tpu_custom_call.1} parent=0
    #allocation2 [shape = 'u8[262144]{0}', space=vmem, size = 0x40000, scoped, tag = 'input window, operand 0, single buffered']
    #allocation3 [shape = 's32[1]{0}', space=sflag, size = 0x4, scoped, tag = 'scoped memory for tpu_custom_call.1']
    #allocation4 [shape = 's32[1]{0}', space=sflag, size = 0x4, scoped, tag = 'scoped memory for tpu_custom_call.1']
    #allocation5 [shape = 'u8[65536]{0}', space=vmem, size = 0x10000, scoped, tag = 'input window, operand 1, single buffered']
    #allocation6 [shape = 's32[1]{0}', space=sflag, size = 0x4, scoped, tag = 'scoped memory for tpu_custom_call.1']
    #allocation7 [shape = 'u8[262144]{0}', space=vmem, size = 0x40000, scoped, tag = 'output window, operand 0, single buffered']
    %9 = vsyncpa [#allocation3], 0
    %10 = vsyncpa [#allocation6], 0
    %11 = vsyncpa [#allocation4], 0
    // Predicated region
    $region2: #{tpu_custom_call.1} parent=1 // pred_check
      _
    $region3: #{tpu_custom_call.1} parent=1 // pred_check_branch
      %13 = sbr.rel (0) target = $region5
    $region4: #{tpu_custom_call.1} parent=1 // pred_region
      %s15 = ssub.s32 8192, 8192
      %16 = vsyncadd [#allocation3], %s15
      %s17 = sshll.u32 [#allocation2], 4
      %s18 = int_to_ptr.vmem [resolvable:$true] %s17
      %23 = dma.hbm_to_vmem [thread:$0]  %s0, 8192, %s18, [#allocation3], 128, 128, 8
    $region5: #{tpu_custom_call.1} parent=1 // pred_fallthru
      _
    // Predicated region
    $region6: #{tpu_custom_call.1} parent=1 // pred_check
      _
    $region7: #{tpu_custom_call.1} parent=1 // pred_check_branch
      %25 = sbr.rel (0) target = $region9
    $region8: #{tpu_custom_call.1} parent=1 // pred_region
      %s27 = ssub.s32 2048, 2048
      %28 = vsyncadd [#allocation6], %s27
      %s29 = sshll.u32 [#allocation5], 4
      %s30 = int_to_ptr.vmem [resolvable:$true] %s29
      %35 = dma.hbm_to_vmem [thread:$0]  %s1, 2048, %s30, [#allocation6], 128, 128, 8
    $region9: #{tpu_custom_call.1} parent=1 // pred_fallthru
      _
    // Predicated region
    $region10: #{tpu_custom_call.1} parent=1 // pred_check
      _
    $region11: #{tpu_custom_call.1} parent=1 // pred_check_branch
      %37 = sbr.rel (0) target = $region13
    $region12: #{tpu_custom_call.1} parent=1 // pred_region
      _
    $region13: #{tpu_custom_call.1} parent=1 // pred_fallthru
      _
    // Predicated region
    $region14: #{tpu_custom_call.1} parent=1 // pred_check
      _
    $region15: #{tpu_custom_call.1} parent=1 // pred_check_branch
      %39 = sbr.rel (0) target = $region17
    $region16: #{tpu_custom_call.1} parent=1 // pred_region
      _
    $region17: #{tpu_custom_call.1} parent=1 // pred_fallthru
      _
    // Predicated region
    $region18: #{tpu_custom_call.1} parent=1 // pred_check
      _
    $region19: #{tpu_custom_call.1} parent=1 // pred_check_branch
      %41 = sbr.rel (0) target = $region21
    $region20: #{tpu_custom_call.1} parent=1 // pred_region
      %42 = dma.done [#allocation3], 8192
    $region21: #{tpu_custom_call.1} parent=1 // pred_fallthru
      _
    // Predicated region
    $region22: #{tpu_custom_call.1} parent=1 // pred_check
      _
    $region23: #{tpu_custom_call.1} parent=1 // pred_check_branch
      %44 = sbr.rel (0) target = $region25
    $region24: #{tpu_custom_call.1} parent=1 // pred_region
      %45 = dma.done [#allocation6], 2048
    $region25: #{tpu_custom_call.1} parent=1 // pred_fallthru
      _
    %v46 = vld [vmem:[#allocation2] sm:$0xff]
    %v47 = vld [vmem:[#allocation2 + $0x8] sm:$0xff]
    %v48 = vld [vmem:[#allocation2 + $0x10] sm:$0xff]
    %v49 = vld [vmem:[#allocation2 + $0x18] sm:$0xff]
    %v50 = vld [vmem:[#allocation2 + $0x20] sm:$0xff]
    %v51 = vld [vmem:[#allocation2 + $0x28] sm:$0xff]
    %v52 = vld [vmem:[#allocation2 + $0x30] sm:$0xff]
    %v53 = vld [vmem:[#allocation2 + $0x38] sm:$0xff]
    %v54 = vld [vmem:[#allocation2 + $0x40] sm:$0xff]
    %v55 = vld [vmem:[#allocation2 + $0x48] sm:$0xff]
    %v56 = vld [vmem:[#allocation2 + $0x50] sm:$0xff]
    %v57 = vld [vmem:[#allocation2 + $0x58] sm:$0xff]
    %v58 = vld [vmem:[#allocation2 + $0x60] sm:$0xff]
    %v59 = vld [vmem:[#allocation2 + $0x68] sm:$0xff]
    %v60 = vld [vmem:[#allocation2 + $0x70] sm:$0xff]
    %v61 = vld [vmem:[#allocation2 + $0x78] sm:$0xff]
    %v62 = vld [vmem:[#allocation2 + $0x80] sm:$0xff]
    %v63 = vld [vmem:[#allocation2 + $0x88] sm:$0xff]
    %v64 = vld [vmem:[#allocation2 + $0x90] sm:$0xff]
    %v65 = vld [vmem:[#allocation2 + $0x98] sm:$0xff]
    %v66 = vld [vmem:[#allocation2 + $0xa0] sm:$0xff]
    %v67 = vld [vmem:[#allocation2 + $0xa8] sm:$0xff]
    %v68 = vld [vmem:[#allocation2 + $0xb0] sm:$0xff]
    %v69 = vld [vmem:[#allocation2 + $0xb8] sm:$0xff]
    %v70 = vld [vmem:[#allocation2 + $0xc0] sm:$0xff]
    %v71 = vld [vmem:[#allocation2 + $0xc8] sm:$0xff]
    %v72 = vld [vmem:[#allocation2 + $0xd0] sm:$0xff]
    %v73 = vld [vmem:[#allocation2 + $0xd8] sm:$0xff]
    %v74 = vld [vmem:[#allocation2 + $0xe0] sm:$0xff]
    %v75 = vld [vmem:[#allocation2 + $0xe8] sm:$0xff]
    %v76 = vld [vmem:[#allocation2 + $0xf0] sm:$0xff]
    %v77 = vld [vmem:[#allocation2 + $0xf8] sm:$0xff]
    %v78 = vld [vmem:[#allocation2 + $0x100] sm:$0xff]
    %v79 = vld [vmem:[#allocation2 + $0x108] sm:$0xff]
    %v80 = vld [vmem:[#allocation2 + $0x110] sm:$0xff]
    %v81 = vld [vmem:[#allocation2 + $0x118] sm:$0xff]
    %v82 = vld [vmem:[#allocation2 + $0x120] sm:$0xff]
    %v83 = vld [vmem:[#allocation2 + $0x128] sm:$0xff]
    %v84 = vld [vmem:[#allocation2 + $0x130] sm:$0xff]
    %v85 = vld [vmem:[#allocation2 + $0x138] sm:$0xff]
    %v86 = vld [vmem:[#allocation2 + $0x140] sm:$0xff]
    %v87 = vld [vmem:[#allocation2 + $0x148] sm:$0xff]
    %v88 = vld [vmem:[#allocation2 + $0x150] sm:$0xff]
    %v89 = vld [vmem:[#allocation2 + $0x158] sm:$0xff]
    %v90 = vld [vmem:[#allocation2 + $0x160] sm:$0xff]
    %v91 = vld [vmem:[#allocation2 + $0x168] sm:$0xff]
    %v92 = vld [vmem:[#allocation2 + $0x170] sm:$0xff]
    %v93 = vld [vmem:[#allocation2 + $0x178] sm:$0xff]
    %v94 = vld [vmem:[#allocation2 + $0x180] sm:$0xff]
    %v95 = vld [vmem:[#allocation2 + $0x188] sm:$0xff]
    %v96 = vld [vmem:[#allocation2 + $0x190] sm:$0xff]
    %v97 = vld [vmem:[#allocation2 + $0x198] sm:$0xff]
    %v98 = vld [vmem:[#allocation2 + $0x1a0] sm:$0xff]
    %v99 = vld [vmem:[#allocation2 + $0x1a8] sm:$0xff]
    %v100 = vld [vmem:[#allocation2 + $0x1b0] sm:$0xff]
    %v101 = vld [vmem:[#allocation2 + $0x1b8] sm:$0xff]
    %v102 = vld [vmem:[#allocation2 + $0x1c0] sm:$0xff]
    %v103 = vld [vmem:[#allocation2 + $0x1c8] sm:$0xff]
    %v104 = vld [vmem:[#allocation2 + $0x1d0] sm:$0xff]
    %v105 = vld [vmem:[#allocation2 + $0x1d8] sm:$0xff]
    %v106 = vld [vmem:[#allocation2 + $0x1e0] sm:$0xff]
    %v107 = vld [vmem:[#allocation2 + $0x1e8] sm:$0xff]
    %v108 = vld [vmem:[#allocation2 + $0x1f0] sm:$0xff]
    %v109 = vld [vmem:[#allocation2 + $0x1f8] sm:$0xff]
    %v110 = vld [vmem:[#allocation5] sm:$0xff]
    %v111 = vld [vmem:[#allocation5 + $0x8] sm:$0xff]
    %v112 = vld [vmem:[#allocation5 + $0x10] sm:$0xff]
    %v113 = vld [vmem:[#allocation5 + $0x18] sm:$0xff]
    %v114 = vld [vmem:[#allocation5 + $0x20] sm:$0xff]
    %v115 = vld [vmem:[#allocation5 + $0x28] sm:$0xff]
    %v116 = vld [vmem:[#allocation5 + $0x30] sm:$0xff]
    %v117 = vld [vmem:[#allocation5 + $0x38] sm:$0xff]
    %v118 = vld [vmem:[#allocation5 + $0x40] sm:$0xff]
    %v119 = vld [vmem:[#allocation5 + $0x48] sm:$0xff]
    %v120 = vld [vmem:[#allocation5 + $0x50] sm:$0xff]
    %v121 = vld [vmem:[#allocation5 + $0x58] sm:$0xff]
    %v122 = vld [vmem:[#allocation5 + $0x60] sm:$0xff]
    %v123 = vld [vmem:[#allocation5 + $0x68] sm:$0xff]
    %v124 = vld [vmem:[#allocation5 + $0x70] sm:$0xff]
    %v125 = vld [vmem:[#allocation5 + $0x78] sm:$0xff]
    %126 = vmatprep.subr.mxu0 0.0
    %127 = vmatpush1.msra.mxu0 %v110
    %128 = vmatprep.subr.mxu0 0.0
    %129 = vmatpush1.msra.mxu0 %v111
    %130 = vmatprep.subr.mxu0 0.0
    %131 = vmatpush1.msra.mxu0 %v112
    %132 = vmatprep.subr.mxu0 0.0
    %133 = vmatpush1.msra.mxu0 %v113
    %134 = vmatprep.subr.mxu0 0.0
    %135 = vmatpush1.msra.mxu0 %v114
    %136 = vmatprep.subr.mxu0 0.0
    %137 = vmatpush1.msra.mxu0 %v115
    %138 = vmatprep.subr.mxu0 0.0
    %139 = vmatpush1.msra.mxu0 %v116
    %140 = vmatprep.subr.mxu0 0.0
    %141 = vmatpush1.msra.mxu0 %v117
    %142 = vmatprep.subr.mxu0 0.0
    %143 = vmatpush1.msra.mxu0 %v118
    %144 = vmatprep.subr.mxu0 0.0
    %145 = vmatpush1.msra.mxu0 %v119
    %146 = vmatprep.subr.mxu0 0.0
    %147 = vmatpush1.msra.mxu0 %v120
    %148 = vmatprep.subr.mxu0 0.0
    %149 = vmatpush1.msra.mxu0 %v121
    %150 = vmatprep.subr.mxu0 0.0
    %151 = vmatpush1.msra.mxu0 %v122
    %152 = vmatprep.subr.mxu0 0.0
    %153 = vmatpush1.msra.mxu0 %v123
    %154 = vmatprep.subr.mxu0 0.0
    %155 = vmatpush1.msra.mxu0 %v124
    %156 = vmatprep.subr.mxu0 0.0
    %157 = vmatpush1.msra.mxu0 %v125
    %158 = vmatprep.subr.mxu0 0.0
    %159 = vmatpush1.msra.mxu0 0.0
    %160 = vmatprep.subr.mxu0 0.0
    %161 = vmatpush1.msra.mxu0 0.0
    %162 = vmatprep.subr.mxu0 0.0
    %163 = vmatpush1.msra.mxu0 0.0
    %164 = vmatprep.subr.mxu0 0.0
    %165 = vmatpush1.msra.mxu0 0.0
    %166 = vmatprep.subr.mxu0 0.0
    %167 = vmatpush1.msra.mxu0 0.0
    %168 = vmatprep.subr.mxu0 0.0
    %169 = vmatpush1.msra.mxu0 0.0
    %170 = vmatprep.subr.mxu0 0.0
    %171 = vmatpush1.msra.mxu0 0.0
    %172 = vmatprep.subr.mxu0 0.0
    %173 = vmatpush1.msra.mxu0 0.0
    %174 = vmatprep.subr.mxu0 0.0
    %175 = vmatpush1.msra.mxu0 0.0
    %176 = vmatprep.subr.mxu0 0.0
    %177 = vmatpush1.msra.mxu0 0.0
    %178 = vmatprep.subr.mxu0 0.0
    %179 = vmatpush1.msra.mxu0 0.0
    %180 = vmatprep.subr.mxu0 0.0
    %181 = vmatpush1.msra.mxu0 0.0
    %182 = vmatprep.subr.mxu0 0.0
    %183 = vmatpush1.msra.mxu0 0.0
    %184 = vmatprep.subr.mxu0 0.0
    %185 = vmatpush1.msra.mxu0 0.0
    %186 = vmatprep.subr.mxu0 0.0
    %187 = vmatpush1.msra.mxu0 0.0
    %188 = vmatprep.subr.mxu0 0.0
    %189 = vmatpush1.msra.mxu0 0.0
    %190 = vmatprep.mubr.f32.mxu0 0.0
    %191 = vmatmul.mubr.f32.gmra.mrb[0].mxu0 %v46
    %v192 = vpop.f32.mrb[0].mxu0
    %v193 = vadd.f32 0.0, %v192
    %v194 = vpop.f32.mrb[0].mxu0
    %195 = vmatprep.mubr.f32.mxu0 0.0
    %196 = vmatmul.mubr.f32.gmra.mrb[0].mxu0 %v47
    %v197 = vpop.f32.mrb[0].mxu0
    %v198 = vadd.f32 0.0, %v197
    %v199 = vpop.f32.mrb[0].mxu0
    %200 = vmatprep.mubr.f32.mxu0 0.0
    %201 = vmatmul.mubr.f32.gmra.mrb[0].mxu0 %v48
    %v202 = vpop.f32.mrb[0].mxu0
    %v203 = vadd.f32 0.0, %v202
    %v204 = vpop.f32.mrb[0].mxu0
    %205 = vmatprep.mubr.f32.mxu0 0.0
    %206 = vmatmul.mubr.f32.gmra.mrb[0].mxu0 %v49
    %v207 = vpop.f32.mrb[0].mxu0
    %v208 = vadd.f32 0.0, %v207
    %v209 = vpop.f32.mrb[0].mxu0
    %210 = vmatprep.mubr.f32.mxu0 0.0
    %211 = vmatmul.mubr.f32.gmra.mrb[0].mxu0 %v50
    %v212 = vpop.f32.mrb[0].mxu0
    %v213 = vadd.f32 0.0, %v212
    %v214 = vpop.f32.mrb[0].mxu0
    %215 = vmatprep.mubr.f32.mxu0 0.0
    %216 = vmatmul.mubr.f32.gmra.mrb[0].mxu0 %v51
    %v217 = vpop.f32.mrb[0].mxu0
    %v218 = vadd.f32 0.0, %v217
    %v219 = vpop.f32.mrb[0].mxu0
    %220 = vmatprep.mubr.f32.mxu0 0.0
    %221 = vmatmul.mubr.f32.gmra.mrb[0].mxu0 %v52
    %v222 = vpop.f32.mrb[0].mxu0
    %v223 = vadd.f32 0.0, %v222
    %v224 = vpop.f32.mrb[0].mxu0
    %225 = vmatprep.mubr.f32.mxu0 0.0
    %226 = vmatmul.mubr.f32.gmra.mrb[0].mxu0 %v53
    %v227 = vpop.f32.mrb[0].mxu0
    %v228 = vadd.f32 0.0, %v227
    %v229 = vpop.f32.mrb[0].mxu0
    %230 = vmatprep.mubr.f32.mxu0 0.0
    %231 = vmatmul.mubr.f32.gmra.mrb[0].mxu0 %v54
    %v232 = vpop.f32.mrb[0].mxu0
    %v233 = vadd.f32 0.0, %v232
    %v234 = vpop.f32.mrb[0].mxu0
    %235 = vmatprep.mubr.f32.mxu0 0.0
    %236 = vmatmul.mubr.f32.gmra.mrb[0].mxu0 %v55
    %v237 = vpop.f32.mrb[0].mxu0
    %v238 = vadd.f32 0.0, %v237
    %v239 = vpop.f32.mrb[0].mxu0
    %240 = vmatprep.mubr.f32.mxu0 0.0
    %241 = vmatmul.mubr.f32.gmra.mrb[0].mxu0 %v56
    %v242 = vpop.f32.mrb[0].mxu0
    %v243 = vadd.f32 0.0, %v242
    %v244 = vpop.f32.mrb[0].mxu0
    %245 = vmatprep.mubr.f32.mxu0 0.0
    %246 = vmatmul.mubr.f32.gmra.mrb[0].mxu0 %v57
    %v247 = vpop.f32.mrb[0].mxu0
    %v248 = vadd.f32 0.0, %v247
    %v249 = vpop.f32.mrb[0].mxu0
    %250 = vmatprep.mubr.f32.mxu0 0.0
    %251 = vmatmul.mubr.f32.gmra.mrb[0].mxu0 %v58
    %v252 = vpop.f32.mrb[0].mxu0
    %v253 = vadd.f32 0.0, %v252
    %v254 = vpop.f32.mrb[0].mxu0
    %255 = vmatprep.mubr.f32.mxu0 0.0
    %256 = vmatmul.mubr.f32.gmra.mrb[0].mxu0 %v59
    %v257 = vpop.f32.mrb[0].mxu0
    %v258 = vadd.f32 0.0, %v257
    %v259 = vpop.f32.mrb[0].mxu0
    %260 = vmatprep.mubr.f32.mxu0 0.0
    %261 = vmatmul.mubr.f32.gmra.mrb[0].mxu0 %v60
    %v262 = vpop.f32.mrb[0].mxu0
    %v263 = vadd.f32 0.0, %v262
    %v264 = vpop.f32.mrb[0].mxu0
    %265 = vmatprep.mubr.f32.mxu0 0.0
    %266 = vmatmul.mubr.f32.gmra.mrb[0].mxu0 %v61
    %v267 = vpop.f32.mrb[0].mxu0
    %v268 = vadd.f32 0.0, %v267
    %v269 = vpop.f32.mrb[0].mxu0
    %270 = vmatprep.mubr.f32.mxu0 0.0
    %271 = vmatmul.mubr.f32.gmra.mrb[0].mxu0 %v62
    %v272 = vpop.f32.mrb[0].mxu0
    %v273 = vadd.f32 0.0, %v272
    %v274 = vpop.f32.mrb[0].mxu0
    %275 = vmatprep.mubr.f32.mxu0 0.0
    %276 = vmatmul.mubr.f32.gmra.mrb[0].mxu0 %v63
    %v277 = vpop.f32.mrb[0].mxu0
    %v278 = vadd.f32 0.0, %v277
    %v279 = vpop.f32.mrb[0].mxu0
    %280 = vmatprep.mubr.f32.mxu0 0.0
    %281 = vmatmul.mubr.f32.gmra.mrb[0].mxu0 %v64
    %v282 = vpop.f32.mrb[0].mxu0
    %v283 = vadd.f32 0.0, %v282
    %v284 = vpop.f32.mrb[0].mxu0
    %285 = vmatprep.mubr.f32.mxu0 0.0
    %286 = vmatmul.mubr.f32.gmra.mrb[0].mxu0 %v65
    %v287 = vpop.f32.mrb[0].mxu0
    %v288 = vadd.f32 0.0, %v287
    %v289 = vpop.f32.mrb[0].mxu0
    %290 = vmatprep.mubr.f32.mxu0 0.0
    %291 = vmatmul.mubr.f32.gmra.mrb[0].mxu0 %v66
    %v292 = vpop.f32.mrb[0].mxu0
    %v293 = vadd.f32 0.0, %v292
    %v294 = vpop.f32.mrb[0].mxu0
    %295 = vmatprep.mubr.f32.mxu0 0.0
    %296 = vmatmul.mubr.f32.gmra.mrb[0].mxu0 %v67
    %v297 = vpop.f32.mrb[0].mxu0
    %v298 = vadd.f32 0.0, %v297
    %v299 = vpop.f32.mrb[0].mxu0
    %300 = vmatprep.mubr.f32.mxu0 0.0
    %301 = vmatmul.mubr.f32.gmra.mrb[0].mxu0 %v68
    %v302 = vpop.f32.mrb[0].mxu0
    %v303 = vadd.f32 0.0, %v302
    %v304 = vpop.f32.mrb[0].mxu0
    %305 = vmatprep.mubr.f32.mxu0 0.0
    %306 = vmatmul.mubr.f32.gmra.mrb[0].mxu0 %v69
    %v307 = vpop.f32.mrb[0].mxu0
    %v308 = vadd.f32 0.0, %v307
    %v309 = vpop.f32.mrb[0].mxu0
    %310 = vmatprep.mubr.f32.mxu0 0.0
    %311 = vmatmul.mubr.f32.gmra.mrb[0].mxu0 %v70
    %v312 = vpop.f32.mrb[0].mxu0
    %v313 = vadd.f32 0.0, %v312
    %v314 = vpop.f32.mrb[0].mxu0
    %315 = vmatprep.mubr.f32.mxu0 0.0
    %316 = vmatmul.mubr.f32.gmra.mrb[0].mxu0 %v71
    %v317 = vpop.f32.mrb[0].mxu0
    %v318 = vadd.f32 0.0, %v317
    %v319 = vpop.f32.mrb[0].mxu0
    %320 = vmatprep.mubr.f32.mxu0 0.0
    %321 = vmatmul.mubr.f32.gmra.mrb[0].mxu0 %v72
    %v322 = vpop.f32.mrb[0].mxu0
    %v323 = vadd.f32 0.0, %v322
    %v324 = vpop.f32.mrb[0].mxu0
    %325 = vmatprep.mubr.f32.mxu0 0.0
    %326 = vmatmul.mubr.f32.gmra.mrb[0].mxu0 %v73
    %v327 = vpop.f32.mrb[0].mxu0
    %v328 = vadd.f32 0.0, %v327
    %v329 = vpop.f32.mrb[0].mxu0
    %330 = vmatprep.mubr.f32.mxu0 0.0
    %331 = vmatmul.mubr.f32.gmra.mrb[0].mxu0 %v74
    %v332 = vpop.f32.mrb[0].mxu0
    %v333 = vadd.f32 0.0, %v332
    %v334 = vpop.f32.mrb[0].mxu0
    %335 = vmatprep.mubr.f32.mxu0 0.0
    %336 = vmatmul.mubr.f32.gmra.mrb[0].mxu0 %v75
    %v337 = vpop.f32.mrb[0].mxu0
    %v338 = vadd.f32 0.0, %v337
    %v339 = vpop.f32.mrb[0].mxu0
    %340 = vmatprep.mubr.f32.mxu0 0.0
    %341 = vmatmul.mubr.f32.gmra.mrb[0].mxu0 %v76
    %v342 = vpop.f32.mrb[0].mxu0
    %v343 = vadd.f32 0.0, %v342
    %v344 = vpop.f32.mrb[0].mxu0
    %345 = vmatprep.mubr.f32.mxu0 0.0
    %346 = vmatmul.mubr.f32.gmra.mrb[0].mxu0 %v77
    %v347 = vpop.f32.mrb[0].mxu0
    %v348 = vadd.f32 0.0, %v347
    %v349 = vpop.f32.mrb[0].mxu0
    %350 = vmatprep.mubr.f32.mxu0 0.0
    %351 = vmatmul.mubr.f32.gmra.mrb[0].mxu0 %v78
    %v352 = vpop.f32.mrb[0].mxu0
    %v353 = vadd.f32 0.0, %v352
    %v354 = vpop.f32.mrb[0].mxu0
    %355 = vmatprep.mubr.f32.mxu0 0.0
    %356 = vmatmul.mubr.f32.gmra.mrb[0].mxu0 %v79
    %v357 = vpop.f32.mrb[0].mxu0
    %v358 = vadd.f32 0.0, %v357
    %v359 = vpop.f32.mrb[0].mxu0
    %360 = vmatprep.mubr.f32.mxu0 0.0
    %361 = vmatmul.mubr.f32.gmra.mrb[0].mxu0 %v80
    %v362 = vpop.f32.mrb[0].mxu0
    %v363 = vadd.f32 0.0, %v362
    %v364 = vpop.f32.mrb[0].mxu0
    %365 = vmatprep.mubr.f32.mxu0 0.0
    %366 = vmatmul.mubr.f32.gmra.mrb[0].mxu0 %v81
    %v367 = vpop.f32.mrb[0].mxu0
    %v368 = vadd.f32 0.0, %v367
    %v369 = vpop.f32.mrb[0].mxu0
    %370 = vmatprep.mubr.f32.mxu0 0.0
    %371 = vmatmul.mubr.f32.gmra.mrb[0].mxu0 %v82
    %v372 = vpop.f32.mrb[0].mxu0
    %v373 = vadd.f32 0.0, %v372
    %v374 = vpop.f32.mrb[0].mxu0
    %375 = vmatprep.mubr.f32.mxu0 0.0
    %376 = vmatmul.mubr.f32.gmra.mrb[0].mxu0 %v83
    %v377 = vpop.f32.mrb[0].mxu0
    %v378 = vadd.f32 0.0, %v377
    %v379 = vpop.f32.mrb[0].mxu0
    %380 = vmatprep.mubr.f32.mxu0 0.0
    %381 = vmatmul.mubr.f32.gmra.mrb[0].mxu0 %v84
    %v382 = vpop.f32.mrb[0].mxu0
    %v383 = vadd.f32 0.0, %v382
    %v384 = vpop.f32.mrb[0].mxu0
    %385 = vmatprep.mubr.f32.mxu0 0.0
    %386 = vmatmul.mubr.f32.gmra.mrb[0].mxu0 %v85
    %v387 = vpop.f32.mrb[0].mxu0
    %v388 = vadd.f32 0.0, %v387
    %v389 = vpop.f32.mrb[0].mxu0
    %390 = vmatprep.mubr.f32.mxu0 0.0
    %391 = vmatmul.mubr.f32.gmra.mrb[0].mxu0 %v86
    %v392 = vpop.f32.mrb[0].mxu0
    %v393 = vadd.f32 0.0, %v392
    %v394 = vpop.f32.mrb[0].mxu0
    %395 = vmatprep.mubr.f32.mxu0 0.0
    %396 = vmatmul.mubr.f32.gmra.mrb[0].mxu0 %v87
    %v397 = vpop.f32.mrb[0].mxu0
    %v398 = vadd.f32 0.0, %v397
    %v399 = vpop.f32.mrb[0].mxu0
    %400 = vmatprep.mubr.f32.mxu0 0.0
    %401 = vmatmul.mubr.f32.gmra.mrb[0].mxu0 %v88
    %v402 = vpop.f32.mrb[0].mxu0
    %v403 = vadd.f32 0.0, %v402
    %v404 = vpop.f32.mrb[0].mxu0
    %405 = vmatprep.mubr.f32.mxu0 0.0
    %406 = vmatmul.mubr.f32.gmra.mrb[0].mxu0 %v89
    %v407 = vpop.f32.mrb[0].mxu0
    %v408 = vadd.f32 0.0, %v407
    %v409 = vpop.f32.mrb[0].mxu0
    %410 = vmatprep.mubr.f32.mxu0 0.0
    %411 = vmatmul.mubr.f32.gmra.mrb[0].mxu0 %v90
    %v412 = vpop.f32.mrb[0].mxu0
    %v413 = vadd.f32 0.0, %v412
    %v414 = vpop.f32.mrb[0].mxu0
    %415 = vmatprep.mubr.f32.mxu0 0.0
    %416 = vmatmul.mubr.f32.gmra.mrb[0].mxu0 %v91
    %v417 = vpop.f32.mrb[0].mxu0
    %v418 = vadd.f32 0.0, %v417
    %v419 = vpop.f32.mrb[0].mxu0
    %420 = vmatprep.mubr.f32.mxu0 0.0
    %421 = vmatmul.mubr.f32.gmra.mrb[0].mxu0 %v92
    %v422 = vpop.f32.mrb[0].mxu0
    %v423 = vadd.f32 0.0, %v422
    %v424 = vpop.f32.mrb[0].mxu0
    %425 = vmatprep.mubr.f32.mxu0 0.0
    %426 = vmatmul.mubr.f32.gmra.mrb[0].mxu0 %v93
    %v427 = vpop.f32.mrb[0].mxu0
    %v428 = vadd.f32 0.0, %v427
    %v429 = vpop.f32.mrb[0].mxu0
    %430 = vmatprep.mubr.f32.mxu0 0.0
    %431 = vmatmul.mubr.f32.gmra.mrb[0].mxu0 %v94
    %v432 = vpop.f32.mrb[0].mxu0
    %v433 = vadd.f32 0.0, %v432
    %v434 = vpop.f32.mrb[0].mxu0
    %435 = vmatprep.mubr.f32.mxu0 0.0
    %436 = vmatmul.mubr.f32.gmra.mrb[0].mxu0 %v95
    %v437 = vpop.f32.mrb[0].mxu0
    %v438 = vadd.f32 0.0, %v437
    %v439 = vpop.f32.mrb[0].mxu0
    %440 = vmatprep.mubr.f32.mxu0 0.0
    %441 = vmatmul.mubr.f32.gmra.mrb[0].mxu0 %v96
    %v442 = vpop.f32.mrb[0].mxu0
    %v443 = vadd.f32 0.0, %v442
    %v444 = vpop.f32.mrb[0].mxu0
    %445 = vmatprep.mubr.f32.mxu0 0.0
    %446 = vmatmul.mubr.f32.gmra.mrb[0].mxu0 %v97
    %v447 = vpop.f32.mrb[0].mxu0
    %v448 = vadd.f32 0.0, %v447
    %v449 = vpop.f32.mrb[0].mxu0
    %450 = vmatprep.mubr.f32.mxu0 0.0
    %451 = vmatmul.mubr.f32.gmra.mrb[0].mxu0 %v98
    %v452 = vpop.f32.mrb[0].mxu0
    %v453 = vadd.f32 0.0, %v452
    %v454 = vpop.f32.mrb[0].mxu0
    %455 = vmatprep.mubr.f32.mxu0 0.0
    %456 = vmatmul.mubr.f32.gmra.mrb[0].mxu0 %v99
    %v457 = vpop.f32.mrb[0].mxu0
    %v458 = vadd.f32 0.0, %v457
    %v459 = vpop.f32.mrb[0].mxu0
    %460 = vmatprep.mubr.f32.mxu0 0.0
    %461 = vmatmul.mubr.f32.gmra.mrb[0].mxu0 %v100
    %v462 = vpop.f32.mrb[0].mxu0
    %v463 = vadd.f32 0.0, %v462
    %v464 = vpop.f32.mrb[0].mxu0
    %465 = vmatprep.mubr.f32.mxu0 0.0
    %466 = vmatmul.mubr.f32.gmra.mrb[0].mxu0 %v101
    %v467 = vpop.f32.mrb[0].mxu0
    %v468 = vadd.f32 0.0, %v467
    %v469 = vpop.f32.mrb[0].mxu0
    %470 = vmatprep.mubr.f32.mxu0 0.0
    %471 = vmatmul.mubr.f32.gmra.mrb[0].mxu0 %v102
    %v472 = vpop.f32.mrb[0].mxu0
    %v473 = vadd.f32 0.0, %v472
    %v474 = vpop.f32.mrb[0].mxu0
    %475 = vmatprep.mubr.f32.mxu0 0.0
    %476 = vmatmul.mubr.f32.gmra.mrb[0].mxu0 %v103
    %v477 = vpop.f32.mrb[0].mxu0
    %v478 = vadd.f32 0.0, %v477
    %v479 = vpop.f32.mrb[0].mxu0
    %480 = vmatprep.mubr.f32.mxu0 0.0
    %481 = vmatmul.mubr.f32.gmra.mrb[0].mxu0 %v104
    %v482 = vpop.f32.mrb[0].mxu0
    %v483 = vadd.f32 0.0, %v482
    %v484 = vpop.f32.mrb[0].mxu0
    %485 = vmatprep.mubr.f32.mxu0 0.0
    %486 = vmatmul.mubr.f32.gmra.mrb[0].mxu0 %v105
    %v487 = vpop.f32.mrb[0].mxu0
    %v488 = vadd.f32 0.0, %v487
    %v489 = vpop.f32.mrb[0].mxu0
    %490 = vmatprep.mubr.f32.mxu0 0.0
    %491 = vmatmul.mubr.f32.gmra.mrb[0].mxu0 %v106
    %v492 = vpop.f32.mrb[0].mxu0
    %v493 = vadd.f32 0.0, %v492
    %v494 = vpop.f32.mrb[0].mxu0
    %495 = vmatprep.mubr.f32.mxu0 0.0
    %496 = vmatmul.mubr.f32.gmra.mrb[0].mxu0 %v107
    %v497 = vpop.f32.mrb[0].mxu0
    %v498 = vadd.f32 0.0, %v497
    %v499 = vpop.f32.mrb[0].mxu0
    %500 = vmatprep.mubr.f32.mxu0 0.0
    %501 = vmatmul.mubr.f32.gmra.mrb[0].mxu0 %v108
    %v502 = vpop.f32.mrb[0].mxu0
    %v503 = vadd.f32 0.0, %v502
    %v504 = vpop.f32.mrb[0].mxu0
    %505 = vmatprep.mubr.f32.mxu0 0.0
    %506 = vmatmul.mubr.f32.gmra.mrb[0].mxu0 %v109
    %v507 = vpop.f32.mrb[0].mxu0
    %v508 = vadd.f32 0.0, %v507
    %v509 = vpop.f32.mrb[0].mxu0
    %510 = vdwg.mxu0
    %v511 = vmax.f32 %v193, 0.0
    %v512 = vmax.f32 %v198, 0.0
    %v513 = vmax.f32 %v203, 0.0
    %v514 = vmax.f32 %v208, 0.0
    %v515 = vmax.f32 %v213, 0.0
    %v516 = vmax.f32 %v218, 0.0
    %v517 = vmax.f32 %v223, 0.0
    %v518 = vmax.f32 %v228, 0.0
    %v519 = vmax.f32 %v233, 0.0
    %v520 = vmax.f32 %v238, 0.0
    %v521 = vmax.f32 %v243, 0.0
    %v522 = vmax.f32 %v248, 0.0
    %v523 = vmax.f32 %v253, 0.0
    %v524 = vmax.f32 %v258, 0.0
    %v525 = vmax.f32 %v263, 0.0
    %v526 = vmax.f32 %v268, 0.0
    %v527 = vmax.f32 %v273, 0.0
    %v528 = vmax.f32 %v278, 0.0
    %v529 = vmax.f32 %v283, 0.0
    %v530 = vmax.f32 %v288, 0.0
    %v531 = vmax.f32 %v293, 0.0
    %v532 = vmax.f32 %v298, 0.0
    %v533 = vmax.f32 %v303, 0.0
    %v534 = vmax.f32 %v308, 0.0
    %v535 = vmax.f32 %v313, 0.0
    %v536 = vmax.f32 %v318, 0.0
    %v537 = vmax.f32 %v323, 0.0
    %v538 = vmax.f32 %v328, 0.0
    %v539 = vmax.f32 %v333, 0.0
    %v540 = vmax.f32 %v338, 0.0
    %v541 = vmax.f32 %v343, 0.0
    %v542 = vmax.f32 %v348, 0.0
    %v543 = vmax.f32 %v353, 0.0
    %v544 = vmax.f32 %v358, 0.0
    %v545 = vmax.f32 %v363, 0.0
    %v546 = vmax.f32 %v368, 0.0
    %v547 = vmax.f32 %v373, 0.0
    %v548 = vmax.f32 %v378, 0.0
    %v549 = vmax.f32 %v383, 0.0
    %v550 = vmax.f32 %v388, 0.0
    %v551 = vmax.f32 %v393, 0.0
    %v552 = vmax.f32 %v398, 0.0
    %v553 = vmax.f32 %v403, 0.0
    %v554 = vmax.f32 %v408, 0.0
    %v555 = vmax.f32 %v413, 0.0
    %v556 = vmax.f32 %v418, 0.0
    %v557 = vmax.f32 %v423, 0.0
    %v558 = vmax.f32 %v428, 0.0
    %v559 = vmax.f32 %v433, 0.0
    %v560 = vmax.f32 %v438, 0.0
    %v561 = vmax.f32 %v443, 0.0
    %v562 = vmax.f32 %v448, 0.0
    %v563 = vmax.f32 %v453, 0.0
    %v564 = vmax.f32 %v458, 0.0
    %v565 = vmax.f32 %v463, 0.0
    %v566 = vmax.f32 %v468, 0.0
    %v567 = vmax.f32 %v473, 0.0
    %v568 = vmax.f32 %v478, 0.0
    %v569 = vmax.f32 %v483, 0.0
    %v570 = vmax.f32 %v488, 0.0
    %v571 = vmax.f32 %v493, 0.0
    %v572 = vmax.f32 %v498, 0.0
    %v573 = vmax.f32 %v503, 0.0
    %v574 = vmax.f32 %v508, 0.0
    %v575 = vld [vmem:[%s2] sm:$0x1]
    %v576 = vld [vmem:[%s3] sm:$0x1]
    %v577 = vadd.f32 %v511, %v512
    %v578 = vadd.f32 %v577, %v513
    %v579 = vadd.f32 %v578, %v514
    %v580 = vadd.f32 %v579, %v515
    %v581 = vadd.f32 %v580, %v516
    %v582 = vadd.f32 %v581, %v517
    %v583 = vadd.f32 %v582, %v518
    %v584 = vadd.f32 %v583, %v519
    %v585 = vadd.f32 %v584, %v520
    %v586 = vadd.f32 %v585, %v521
    %v587 = vadd.f32 %v586, %v522
    %v588 = vadd.f32 %v587, %v523
    %v589 = vadd.f32 %v588, %v524
    %v590 = vadd.f32 %v589, %v525
    %v591 = vadd.f32 %v590, %v526
    %v592 = vadd.f32 %v591, %v527
    %v593 = vadd.f32 %v592, %v528
    %v594 = vadd.f32 %v593, %v529
    %v595 = vadd.f32 %v594, %v530
    %v596 = vadd.f32 %v595, %v531
    %v597 = vadd.f32 %v596, %v532
    %v598 = vadd.f32 %v597, %v533
    %v599 = vadd.f32 %v598, %v534
    %v600 = vadd.f32 %v599, %v535
    %v601 = vadd.f32 %v600, %v536
    %v602 = vadd.f32 %v601, %v537
    %v603 = vadd.f32 %v602, %v538
    %v604 = vadd.f32 %v603, %v539
    %v605 = vadd.f32 %v604, %v540
    %v606 = vadd.f32 %v605, %v541
    %v607 = vadd.f32 %v606, %v542
    %v608 = vadd.f32 %v607, %v543
    %v609 = vadd.f32 %v608, %v544
    %v610 = vadd.f32 %v609, %v545
    %v611 = vadd.f32 %v610, %v546
    %v612 = vadd.f32 %v611, %v547
    %v613 = vadd.f32 %v612, %v548
    %v614 = vadd.f32 %v613, %v549
    %v615 = vadd.f32 %v614, %v550
    %v616 = vadd.f32 %v615, %v551
    %v617 = vadd.f32 %v616, %v552
    %v618 = vadd.f32 %v617, %v553
    %v619 = vadd.f32 %v618, %v554
    %v620 = vadd.f32 %v619, %v555
    %v621 = vadd.f32 %v620, %v556
    %v622 = vadd.f32 %v621, %v557
    %v623 = vadd.f32 %v622, %v558
    %v624 = vadd.f32 %v623, %v559
    %v625 = vadd.f32 %v624, %v560
    %v626 = vadd.f32 %v625, %v561
    %v627 = vadd.f32 %v626, %v562
    %v628 = vadd.f32 %v627, %v563
    %v629 = vadd.f32 %v628, %v564
    %v630 = vadd.f32 %v629, %v565
    %v631 = vadd.f32 %v630, %v566
    %v632 = vadd.f32 %v631, %v567
    %v633 = vadd.f32 %v632, %v568
    %v634 = vadd.f32 %v633, %v569
    %v635 = vadd.f32 %v634, %v570
    %v636 = vadd.f32 %v635, %v571
    %v637 = vadd.f32 %v636, %v572
    %v638 = vadd.f32 %v637, %v573
    %v639 = vadd.f32 %v638, %v574
    %v640 = vrot.slane %v639, 4
    %v641 = vadd.f32 %v639, %v640
    %v642 = vrot.slane %v641, 2
    %v643 = vadd.f32 %v641, %v642
    %v644 = vrot.slane %v643, 1
    %v645 = vadd.f32 %v643, %v644
    %v646 = vrcp.pop 512.0
    %v647 = vmul.f32 %v645, %v646
    %v648 = vsub.f32 %v511, %v647
    %v649 = vsub.f32 %v512, %v647
    %v650 = vsub.f32 %v513, %v647
    %v651 = vsub.f32 %v514, %v647
    %v652 = vsub.f32 %v515, %v647
    %v653 = vsub.f32 %v516, %v647
    %v654 = vsub.f32 %v517, %v647
    %v655 = vsub.f32 %v518, %v647
    %v656 = vsub.f32 %v519, %v647
    %v657 = vsub.f32 %v520, %v647
    %v658 = vsub.f32 %v521, %v647
    %v659 = vsub.f32 %v522, %v647
    %v660 = vsub.f32 %v523, %v647
    %v661 = vsub.f32 %v524, %v647
    %v662 = vsub.f32 %v525, %v647
    %v663 = vsub.f32 %v526, %v647
    %v664 = vsub.f32 %v527, %v647
    %v665 = vsub.f32 %v528, %v647
    %v666 = vsub.f32 %v529, %v647
    %v667 = vsub.f32 %v530, %v647
    %v668 = vsub.f32 %v531, %v647
    %v669 = vsub.f32 %v532, %v647
    %v670 = vsub.f32 %v533, %v647
    %v671 = vsub.f32 %v534, %v647
    %v672 = vsub.f32 %v535, %v647
    %v673 = vsub.f32 %v536, %v647
    %v674 = vsub.f32 %v537, %v647
    %v675 = vsub.f32 %v538, %v647
    %v676 = vsub.f32 %v539, %v647
    %v677 = vsub.f32 %v540, %v647
    %v678 = vsub.f32 %v541, %v647
    %v679 = vsub.f32 %v542, %v647
    %v680 = vsub.f32 %v543, %v647
    %v681 = vsub.f32 %v544, %v647
    %v682 = vsub.f32 %v545, %v647
    %v683 = vsub.f32 %v546, %v647
    %v684 = vsub.f32 %v547, %v647
    %v685 = vsub.f32 %v548, %v647
    %v686 = vsub.f32 %v549, %v647
    %v687 = vsub.f32 %v550, %v647
    %v688 = vsub.f32 %v551, %v647
    %v689 = vsub.f32 %v552, %v647
    %v690 = vsub.f32 %v553, %v647
    %v691 = vsub.f32 %v554, %v647
    %v692 = vsub.f32 %v555, %v647
    %v693 = vsub.f32 %v556, %v647
    %v694 = vsub.f32 %v557, %v647
    %v695 = vsub.f32 %v558, %v647
    %v696 = vsub.f32 %v559, %v647
    %v697 = vsub.f32 %v560, %v647
    %v698 = vsub.f32 %v561, %v647
    %v699 = vsub.f32 %v562, %v647
    %v700 = vsub.f32 %v563, %v647
    %v701 = vsub.f32 %v564, %v647
    %v702 = vsub.f32 %v565, %v647
    %v703 = vsub.f32 %v566, %v647
    %v704 = vsub.f32 %v567, %v647
    %v705 = vsub.f32 %v568, %v647
    %v706 = vsub.f32 %v569, %v647
    %v707 = vsub.f32 %v570, %v647
    %v708 = vsub.f32 %v571, %v647
    %v709 = vsub.f32 %v572, %v647
    %v710 = vsub.f32 %v573, %v647
    %v711 = vsub.f32 %v574, %v647
    %v712 = vmul.f32 %v648, %v648
    %v713 = vmul.f32 %v649, %v649
    %v714 = vmul.f32 %v650, %v650
    %v715 = vmul.f32 %v651, %v651
    %v716 = vmul.f32 %v652, %v652
    %v717 = vmul.f32 %v653, %v653
    %v718 = vmul.f32 %v654, %v654
    %v719 = vmul.f32 %v655, %v655
    %v720 = vmul.f32 %v656, %v656
    %v721 = vmul.f32 %v657, %v657
    %v722 = vmul.f32 %v658, %v658
    %v723 = vmul.f32 %v659, %v659
    %v724 = vmul.f32 %v660, %v660
    %v725 = vmul.f32 %v661, %v661
    %v726 = vmul.f32 %v662, %v662
    %v727 = vmul.f32 %v663, %v663
    %v728 = vmul.f32 %v664, %v664
    %v729 = vmul.f32 %v665, %v665
    %v730 = vmul.f32 %v666, %v666
    %v731 = vmul.f32 %v667, %v667
    %v732 = vmul.f32 %v668, %v668
    %v733 = vmul.f32 %v669, %v669
    %v734 = vmul.f32 %v670, %v670
    %v735 = vmul.f32 %v671, %v671
    %v736 = vmul.f32 %v672, %v672
    %v737 = vmul.f32 %v673, %v673
    %v738 = vmul.f32 %v674, %v674
    %v739 = vmul.f32 %v675, %v675
    %v740 = vmul.f32 %v676, %v676
    %v741 = vmul.f32 %v677, %v677
    %v742 = vmul.f32 %v678, %v678
    %v743 = vmul.f32 %v679, %v679
    %v744 = vmul.f32 %v680, %v680
    %v745 = vmul.f32 %v681, %v681
    %v746 = vmul.f32 %v682, %v682
    %v747 = vmul.f32 %v683, %v683
    %v748 = vmul.f32 %v684, %v684
    %v749 = vmul.f32 %v685, %v685
    %v750 = vmul.f32 %v686, %v686
    %v751 = vmul.f32 %v687, %v687
    %v752 = vmul.f32 %v688, %v688
    %v753 = vmul.f32 %v689, %v689
    %v754 = vmul.f32 %v690, %v690
    %v755 = vmul.f32 %v691, %v691
    %v756 = vmul.f32 %v692, %v692
    %v757 = vmul.f32 %v693, %v693
    %v758 = vmul.f32 %v694, %v694
    %v759 = vmul.f32 %v695, %v695
    %v760 = vmul.f32 %v696, %v696
    %v761 = vmul.f32 %v697, %v697
    %v762 = vmul.f32 %v698, %v698
    %v763 = vmul.f32 %v699, %v699
    %v764 = vmul.f32 %v700, %v700
    %v765 = vmul.f32 %v701, %v701
    %v766 = vmul.f32 %v702, %v702
    %v767 = vmul.f32 %v703, %v703
    %v768 = vmul.f32 %v704, %v704
    %v769 = vmul.f32 %v705, %v705
    %v770 = vmul.f32 %v706, %v706
    %v771 = vmul.f32 %v707, %v707
    %v772 = vmul.f32 %v708, %v708
    %v773 = vmul.f32 %v709, %v709
    %v774 = vmul.f32 %v710, %v710
    %v775 = vmul.f32 %v711, %v711
    %v776 = vadd.f32 %v712, %v713
    %v777 = vadd.f32 %v776, %v714
    %v778 = vadd.f32 %v777, %v715
    %v779 = vadd.f32 %v778, %v716
    %v780 = vadd.f32 %v779, %v717
    %v781 = vadd.f32 %v780, %v718
    %v782 = vadd.f32 %v781, %v719
    %v783 = vadd.f32 %v782, %v720
    %v784 = vadd.f32 %v783, %v721
    %v785 = vadd.f32 %v784, %v722
    %v786 = vadd.f32 %v785, %v723
    %v787 = vadd.f32 %v786, %v724
    %v788 = vadd.f32 %v787, %v725
    %v789 = vadd.f32 %v788, %v726
    %v790 = vadd.f32 %v789, %v727
    %v791 = vadd.f32 %v790, %v728
    %v792 = vadd.f32 %v791, %v729
    %v793 = vadd.f32 %v792, %v730
    %v794 = vadd.f32 %v793, %v731
    %v795 = vadd.f32 %v794, %v732
    %v796 = vadd.f32 %v795, %v733
    %v797 = vadd.f32 %v796, %v734
    %v798 = vadd.f32 %v797, %v735
    %v799 = vadd.f32 %v798, %v736
    %v800 = vadd.f32 %v799, %v737
    %v801 = vadd.f32 %v800, %v738
    %v802 = vadd.f32 %v801, %v739
    %v803 = vadd.f32 %v802, %v740
    %v804 = vadd.f32 %v803, %v741
    %v805 = vadd.f32 %v804, %v742
    %v806 = vadd.f32 %v805, %v743
    %v807 = vadd.f32 %v806, %v744
    %v808 = vadd.f32 %v807, %v745
    %v809 = vadd.f32 %v808, %v746
    %v810 = vadd.f32 %v809, %v747
    %v811 = vadd.f32 %v810, %v748
    %v812 = vadd.f32 %v811, %v749
    %v813 = vadd.f32 %v812, %v750
    %v814 = vadd.f32 %v813, %v751
    %v815 = vadd.f32 %v814, %v752
    %v816 = vadd.f32 %v815, %v753
    %v817 = vadd.f32 %v816, %v754
    %v818 = vadd.f32 %v817, %v755
    %v819 = vadd.f32 %v818, %v756
    %v820 = vadd.f32 %v819, %v757
    %v821 = vadd.f32 %v820, %v758
    %v822 = vadd.f32 %v821, %v759
    %v823 = vadd.f32 %v822, %v760
    %v824 = vadd.f32 %v823, %v761
    %v825 = vadd.f32 %v824, %v762
    %v826 = vadd.f32 %v825, %v763
    %v827 = vadd.f32 %v826, %v764
    %v828 = vadd.f32 %v827, %v765
    %v829 = vadd.f32 %v828, %v766
    %v830 = vadd.f32 %v829, %v767
    %v831 = vadd.f32 %v830, %v768
    %v832 = vadd.f32 %v831, %v769
    %v833 = vadd.f32 %v832, %v770
    %v834 = vadd.f32 %v833, %v771
    %v835 = vadd.f32 %v834, %v772
    %v836 = vadd.f32 %v835, %v773
    %v837 = vadd.f32 %v836, %v774
    %v838 = vadd.f32 %v837, %v775
    %v839 = vrot.slane %v838, 4
    %v840 = vadd.f32 %v838, %v839
    %v841 = vrot.slane %v840, 2
    %v842 = vadd.f32 %v840, %v841
    %v843 = vrot.slane %v842, 1
    %v844 = vadd.f32 %v842, %v843
    %v845 = vmul.f32 %v844, %v646
    %v846 = vadd.f32 %v845, 1e-05
    %v847 = vrsqrt.pop %v846
    %v848 = vmul.f32 %v648, %v847
    %v849 = vmul.f32 %v649, %v847
    %v850 = vmul.f32 %v650, %v847
    %v851 = vmul.f32 %v651, %v847
    %v852 = vmul.f32 %v652, %v847
    %v853 = vmul.f32 %v653, %v847
    %v854 = vmul.f32 %v654, %v847
    %v855 = vmul.f32 %v655, %v847
    %v856 = vmul.f32 %v656, %v847
    %v857 = vmul.f32 %v657, %v847
    %v858 = vmul.f32 %v658, %v847
    %v859 = vmul.f32 %v659, %v847
    %v860 = vmul.f32 %v660, %v847
    %v861 = vmul.f32 %v661, %v847
    %v862 = vmul.f32 %v662, %v847
    %v863 = vmul.f32 %v663, %v847
    %v864 = vmul.f32 %v664, %v847
    %v865 = vmul.f32 %v665, %v847
    %v866 = vmul.f32 %v666, %v847
    %v867 = vmul.f32 %v667, %v847
    %v868 = vmul.f32 %v668, %v847
    %v869 = vmul.f32 %v669, %v847
    %v870 = vmul.f32 %v670, %v847
    %v871 = vmul.f32 %v671, %v847
    %v872 = vmul.f32 %v672, %v847
    %v873 = vmul.f32 %v673, %v847
    %v874 = vmul.f32 %v674, %v847
    %v875 = vmul.f32 %v675, %v847
    %v876 = vmul.f32 %v676, %v847
    %v877 = vmul.f32 %v677, %v847
    %v878 = vmul.f32 %v678, %v847
    %v879 = vmul.f32 %v679, %v847
    %v880 = vmul.f32 %v680, %v847
    %v881 = vmul.f32 %v681, %v847
    %v882 = vmul.f32 %v682, %v847
    %v883 = vmul.f32 %v683, %v847
    %v884 = vmul.f32 %v684, %v847
    %v885 = vmul.f32 %v685, %v847
    %v886 = vmul.f32 %v686, %v847
    %v887 = vmul.f32 %v687, %v847
    %v888 = vmul.f32 %v688, %v847
    %v889 = vmul.f32 %v689, %v847
    %v890 = vmul.f32 %v690, %v847
    %v891 = vmul.f32 %v691, %v847
    %v892 = vmul.f32 %v692, %v847
    %v893 = vmul.f32 %v693, %v847
    %v894 = vmul.f32 %v694, %v847
    %v895 = vmul.f32 %v695, %v847
    %v896 = vmul.f32 %v696, %v847
    %v897 = vmul.f32 %v697, %v847
    %v898 = vmul.f32 %v698, %v847
    %v899 = vmul.f32 %v699, %v847
    %v900 = vmul.f32 %v700, %v847
    %v901 = vmul.f32 %v701, %v847
    %v902 = vmul.f32 %v702, %v847
    %v903 = vmul.f32 %v703, %v847
    %v904 = vmul.f32 %v704, %v847
    %v905 = vmul.f32 %v705, %v847
    %v906 = vmul.f32 %v706, %v847
    %v907 = vmul.f32 %v707, %v847
    %v908 = vmul.f32 %v708, %v847
    %v909 = vmul.f32 %v709, %v847
    %v910 = vmul.f32 %v710, %v847
    %v911 = vmul.f32 %v711, %v847
    %v913 = vlaneseq
    %v914 = vshrl.u32 %v913, 7
    %v915 = vsub.s32 0, %v914
    %v916 = vrot.slane %v575, %v915
    %v918 = vmul.f32 %v848, %v916
    %v919 = vmul.f32 %v849, %v916
    %v920 = vmul.f32 %v850, %v916
    %v921 = vmul.f32 %v851, %v916
    %v922 = vmul.f32 %v852, %v916
    %v923 = vmul.f32 %v853, %v916
    %v924 = vmul.f32 %v854, %v916
    %v925 = vmul.f32 %v855, %v916
    %v926 = vmul.f32 %v856, %v916
    %v927 = vmul.f32 %v857, %v916
    %v928 = vmul.f32 %v858, %v916
    %v929 = vmul.f32 %v859, %v916
    %v930 = vmul.f32 %v860, %v916
    %v931 = vmul.f32 %v861, %v916
    %v932 = vmul.f32 %v862, %v916
    %v933 = vmul.f32 %v863, %v916
    %v934 = vmul.f32 %v864, %v916
    %v935 = vmul.f32 %v865, %v916
    %v936 = vmul.f32 %v866, %v916
    %v937 = vmul.f32 %v867, %v916
    %v938 = vmul.f32 %v868, %v916
    %v939 = vmul.f32 %v869, %v916
    %v940 = vmul.f32 %v870, %v916
    %v941 = vmul.f32 %v871, %v916
    %v942 = vmul.f32 %v872, %v916
    %v943 = vmul.f32 %v873, %v916
    %v944 = vmul.f32 %v874, %v916
    %v945 = vmul.f32 %v875, %v916
    %v946 = vmul.f32 %v876, %v916
    %v947 = vmul.f32 %v877, %v916
    %v948 = vmul.f32 %v878, %v916
    %v949 = vmul.f32 %v879, %v916
    %v950 = vmul.f32 %v880, %v916
    %v951 = vmul.f32 %v881, %v916
    %v952 = vmul.f32 %v882, %v916
    %v953 = vmul.f32 %v883, %v916
    %v954 = vmul.f32 %v884, %v916
    %v955 = vmul.f32 %v885, %v916
    %v956 = vmul.f32 %v886, %v916
    %v957 = vmul.f32 %v887, %v916
    %v958 = vmul.f32 %v888, %v916
    %v959 = vmul.f32 %v889, %v916
    %v960 = vmul.f32 %v890, %v916
    %v961 = vmul.f32 %v891, %v916
    %v962 = vmul.f32 %v892, %v916
    %v963 = vmul.f32 %v893, %v916
    %v964 = vmul.f32 %v894, %v916
    %v965 = vmul.f32 %v895, %v916
    %v966 = vmul.f32 %v896, %v916
    %v967 = vmul.f32 %v897, %v916
    %v968 = vmul.f32 %v898, %v916
    %v969 = vmul.f32 %v899, %v916
    %v970 = vmul.f32 %v900, %v916
    %v971 = vmul.f32 %v901, %v916
    %v972 = vmul.f32 %v902, %v916
    %v973 = vmul.f32 %v903, %v916
    %v974 = vmul.f32 %v904, %v916
    %v975 = vmul.f32 %v905, %v916
    %v976 = vmul.f32 %v906, %v916
    %v977 = vmul.f32 %v907, %v916
    %v978 = vmul.f32 %v908, %v916
    %v979 = vmul.f32 %v909, %v916
    %v980 = vmul.f32 %v910, %v916
    %v981 = vmul.f32 %v911, %v916
    %v983 = vlaneseq
    %v984 = vshrl.u32 %v983, 7
    %v985 = vsub.s32 0, %v984
    %v986 = vrot.slane %v576, %v985
    %v988 = vadd.f32 %v918, %v986
    %v989 = vadd.f32 %v919, %v986
    %v990 = vadd.f32 %v920, %v986
    %v991 = vadd.f32 %v921, %v986
    %v992 = vadd.f32 %v922, %v986
    %v993 = vadd.f32 %v923, %v986
    %v994 = vadd.f32 %v924, %v986
    %v995 = vadd.f32 %v925, %v986
    %v996 = vadd.f32 %v926, %v986
    %v997 = vadd.f32 %v927, %v986
    %v998 = vadd.f32 %v928, %v986
    %v999 = vadd.f32 %v929, %v986
    %v1000 = vadd.f32 %v930, %v986
    %v1001 = vadd.f32 %v931, %v986
    %v1002 = vadd.f32 %v932, %v986
    %v1003 = vadd.f32 %v933, %v986
    %v1004 = vadd.f32 %v934, %v986
    %v1005 = vadd.f32 %v935, %v986
    %v1006 = vadd.f32 %v936, %v986
    %v1007 = vadd.f32 %v937, %v986
    %v1008 = vadd.f32 %v938, %v986
    %v1009 = vadd.f32 %v939, %v986
    %v1010 = vadd.f32 %v940, %v986
    %v1011 = vadd.f32 %v941, %v986
    %v1012 = vadd.f32 %v942, %v986
    %v1013 = vadd.f32 %v943, %v986
    %v1014 = vadd.f32 %v944, %v986
    %v1015 = vadd.f32 %v945, %v986
    %v1016 = vadd.f32 %v946, %v986
    %v1017 = vadd.f32 %v947, %v986
    %v1018 = vadd.f32 %v948, %v986
    %v1019 = vadd.f32 %v949, %v986
    %v1020 = vadd.f32 %v950, %v986
    %v1021 = vadd.f32 %v951, %v986
    %v1022 = vadd.f32 %v952, %v986
    %v1023 = vadd.f32 %v953, %v986
    %v1024 = vadd.f32 %v954, %v986
    %v1025 = vadd.f32 %v955, %v986
    %v1026 = vadd.f32 %v956, %v986
    %v1027 = vadd.f32 %v957, %v986
    %v1028 = vadd.f32 %v958, %v986
    %v1029 = vadd.f32 %v959, %v986
    %v1030 = vadd.f32 %v960, %v986
    %v1031 = vadd.f32 %v961, %v986
    %v1032 = vadd.f32 %v962, %v986
    %v1033 = vadd.f32 %v963, %v986
    %v1034 = vadd.f32 %v964, %v986
    %v1035 = vadd.f32 %v965, %v986
    %v1036 = vadd.f32 %v966, %v986
    %v1037 = vadd.f32 %v967, %v986
    %v1038 = vadd.f32 %v968, %v986
    %v1039 = vadd.f32 %v969, %v986
    %v1040 = vadd.f32 %v970, %v986
    %v1041 = vadd.f32 %v971, %v986
    %v1042 = vadd.f32 %v972, %v986
    %v1043 = vadd.f32 %v973, %v986
    %v1044 = vadd.f32 %v974, %v986
    %v1045 = vadd.f32 %v975, %v986
    %v1046 = vadd.f32 %v976, %v986
    %v1047 = vadd.f32 %v977, %v986
    %v1048 = vadd.f32 %v978, %v986
    %v1049 = vadd.f32 %v979, %v986
    %v1050 = vadd.f32 %v980, %v986
    %v1051 = vadd.f32 %v981, %v986
    %1052 = vst [vmem:[#allocation7] sm:$0xff] %v988
    %1053 = vst [vmem:[#allocation7 + $0x8] sm:$0xff] %v989
    %1054 = vst [vmem:[#allocation7 + $0x10] sm:$0xff] %v990
    %1055 = vst [vmem:[#allocation7 + $0x18] sm:$0xff] %v991
    %1056 = vst [vmem:[#allocation7 + $0x20] sm:$0xff] %v992
    %1057 = vst [vmem:[#allocation7 + $0x28] sm:$0xff] %v993
    %1058 = vst [vmem:[#allocation7 + $0x30] sm:$0xff] %v994
    %1059 = vst [vmem:[#allocation7 + $0x38] sm:$0xff] %v995
    %1060 = vst [vmem:[#allocation7 + $0x40] sm:$0xff] %v996
    %1061 = vst [vmem:[#allocation7 + $0x48] sm:$0xff] %v997
    %1062 = vst [vmem:[#allocation7 + $0x50] sm:$0xff] %v998
    %1063 = vst [vmem:[#allocation7 + $0x58] sm:$0xff] %v999
    %1064 = vst [vmem:[#allocation7 + $0x60] sm:$0xff] %v1000
    %1065 = vst [vmem:[#allocation7 + $0x68] sm:$0xff] %v1001
    %1066 = vst [vmem:[#allocation7 + $0x70] sm:$0xff] %v1002
    %1067 = vst [vmem:[#allocation7 + $0x78] sm:$0xff] %v1003
    %1068 = vst [vmem:[#allocation7 + $0x80] sm:$0xff] %v1004
    %1069 = vst [vmem:[#allocation7 + $0x88] sm:$0xff] %v1005
    %1070 = vst [vmem:[#allocation7 + $0x90] sm:$0xff] %v1006
    %1071 = vst [vmem:[#allocation7 + $0x98] sm:$0xff] %v1007
    %1072 = vst [vmem:[#allocation7 + $0xa0] sm:$0xff] %v1008
    %1073 = vst [vmem:[#allocation7 + $0xa8] sm:$0xff] %v1009
    %1074 = vst [vmem:[#allocation7 + $0xb0] sm:$0xff] %v1010
    %1075 = vst [vmem:[#allocation7 + $0xb8] sm:$0xff] %v1011
    %1076 = vst [vmem:[#allocation7 + $0xc0] sm:$0xff] %v1012
    %1077 = vst [vmem:[#allocation7 + $0xc8] sm:$0xff] %v1013
    %1078 = vst [vmem:[#allocation7 + $0xd0] sm:$0xff] %v1014
    %1079 = vst [vmem:[#allocation7 + $0xd8] sm:$0xff] %v1015
    %1080 = vst [vmem:[#allocation7 + $0xe0] sm:$0xff] %v1016
    %1081 = vst [vmem:[#allocation7 + $0xe8] sm:$0xff] %v1017
    %1082 = vst [vmem:[#allocation7 + $0xf0] sm:$0xff] %v1018
    %1083 = vst [vmem:[#allocation7 + $0xf8] sm:$0xff] %v1019
    %1084 = vst [vmem:[#allocation7 + $0x100] sm:$0xff] %v1020
    %1085 = vst [vmem:[#allocation7 + $0x108] sm:$0xff] %v1021
    %1086 = vst [vmem:[#allocation7 + $0x110] sm:$0xff] %v1022
    %1087 = vst [vmem:[#allocation7 + $0x118] sm:$0xff] %v1023
    %1088 = vst [vmem:[#allocation7 + $0x120] sm:$0xff] %v1024
    %1089 = vst [vmem:[#allocation7 + $0x128] sm:$0xff] %v1025
    %1090 = vst [vmem:[#allocation7 + $0x130] sm:$0xff] %v1026
    %1091 = vst [vmem:[#allocation7 + $0x138] sm:$0xff] %v1027
    %1092 = vst [vmem:[#allocation7 + $0x140] sm:$0xff] %v1028
    %1093 = vst [vmem:[#allocation7 + $0x148] sm:$0xff] %v1029
    %1094 = vst [vmem:[#allocation7 + $0x150] sm:$0xff] %v1030
    %1095 = vst [vmem:[#allocation7 + $0x158] sm:$0xff] %v1031
    %1096 = vst [vmem:[#allocation7 + $0x160] sm:$0xff] %v1032
    %1097 = vst [vmem:[#allocation7 + $0x168] sm:$0xff] %v1033
    %1098 = vst [vmem:[#allocation7 + $0x170] sm:$0xff] %v1034
    %1099 = vst [vmem:[#allocation7 + $0x178] sm:$0xff] %v1035
    %1100 = vst [vmem:[#allocation7 + $0x180] sm:$0xff] %v1036
    %1101 = vst [vmem:[#allocation7 + $0x188] sm:$0xff] %v1037
    %1102 = vst [vmem:[#allocation7 + $0x190] sm:$0xff] %v1038
    %1103 = vst [vmem:[#allocation7 + $0x198] sm:$0xff] %v1039
    %1104 = vst [vmem:[#allocation7 + $0x1a0] sm:$0xff] %v1040
    %1105 = vst [vmem:[#allocation7 + $0x1a8] sm:$0xff] %v1041
    %1106 = vst [vmem:[#allocation7 + $0x1b0] sm:$0xff] %v1042
    %1107 = vst [vmem:[#allocation7 + $0x1b8] sm:$0xff] %v1043
    %1108 = vst [vmem:[#allocation7 + $0x1c0] sm:$0xff] %v1044
    %1109 = vst [vmem:[#allocation7 + $0x1c8] sm:$0xff] %v1045
    %1110 = vst [vmem:[#allocation7 + $0x1d0] sm:$0xff] %v1046
    %1111 = vst [vmem:[#allocation7 + $0x1d8] sm:$0xff] %v1047
    %1112 = vst [vmem:[#allocation7 + $0x1e0] sm:$0xff] %v1048
    %1113 = vst [vmem:[#allocation7 + $0x1e8] sm:$0xff] %v1049
    %1114 = vst [vmem:[#allocation7 + $0x1f0] sm:$0xff] %v1050
    %1115 = vst [vmem:[#allocation7 + $0x1f8] sm:$0xff] %v1051
    // Predicated region
    $region26: #{tpu_custom_call.1} parent=1 // pred_check
      _
    $region27: #{tpu_custom_call.1} parent=1 // pred_check_branch
      %1117 = sbr.rel (0) target = $region29
    $region28: #{tpu_custom_call.1} parent=1 // pred_region
      %s1119 = ssub.s32 8192, 8192
      %1120 = vsyncadd [#allocation4], %s1119
      %s1121 = sshll.u32 [#allocation7], 4
      %s1122 = int_to_ptr.vmem [resolvable:$true] %s1121
      %1127 = dma.vmem_to_hbm [thread:$0]  %s1122, 8192, %s4, [#allocation4], 128, 128, 8
    $region29: #{tpu_custom_call.1} parent=1 // pred_fallthru
      _
    // Predicated region
    $region30: #{tpu_custom_call.1} parent=1 // pred_check
      _
    $region31: #{tpu_custom_call.1} parent=1 // pred_check_branch
      %1129 = sbr.rel (0) target = $region33
    $region32: #{tpu_custom_call.1} parent=1 // pred_region
      %1130 = dma.done [#allocation4], 8192
    $region33: #{tpu_custom_call.1} parent=1 // pred_fallthru
      _
    %1131 = vsyncpa [#allocation3], 1
    %1132 = vsyncpa [#allocation6], 1
    %1133 = vsyncpa [#allocation4], 1

</llo_original>
